<compile_context>
chip_gen: v7x
topology: tpu7x:2x2x1
jax: 0.10.0
libtpu: 0.0.40
codegen_flags: <defaults>
</compile_context>

<pallas_src>
import functools

import jax
import jax.numpy as jnp
from jax import lax
from jax.experimental import pallas as pl
from jax.experimental.pallas import tpu as pltpu

_LANE = 128
_PAD_LOGIT = -1e9   # with a zero one-hot this contributes exactly 0 loss


def _round_up(x: int, m: int) -> int:
    return (x + m - 1) // m * m


def _focal_kernel(x_ref, y_ref, out_ref, *, gamma, total_rows, block_rows):
    x = x_ref[...].astype(jnp.float32)     # (TR, 128) logits, lane/sublane dense
    y = y_ref[...] != 0                    # (TR, 128) bool one-hot (int8 in HBM)

    if total_rows % block_rows != 0:
        # Only the last tile has rows past the end of the array; Pallas gives
        # unspecified data there, so force the zero-loss pad values.
        rows_left = total_rows - pl.program_id(0) * block_rows
        row = lax.broadcasted_iota(jnp.int32, x.shape, 0)
        valid = row < rows_left
        x = jnp.where(valid, x, _PAD_LOGIT)
        y = jnp.logical_and(y, valid)

    # q = sigmoid(-|x|) = exp(-|x|) / (1 + exp(-|x|)) with a single EUP tanh.
    q = 0.5 * jnp.tanh(-0.5 * jnp.abs(x)) + 0.5           # in (0, 0.5]

    # Numerically stable BCE-with-logits against the one-hot target:
    #   bce = max(x, 0) - x*y + log1p(exp(-|x|)),   log1p(exp(-|x|)) = -log1p(-q)
    bce = jnp.maximum(x, 0.0) - jnp.where(y, x, 0.0) - jnp.log1p(-q)

    # pt = exp(-bce); algebraically  1 - pt = q if (y == (x >= 0)) else 1 - q.
    one_minus_pt = jnp.where(y == (x >= 0.0), q, 1.0 - q)

    # (1 - pt) ** gamma: multiply chain for small integer gamma (default 2),
    # so no pow (exp+log) on the single EUP unit; pow fallback otherwise.
    g = float(gamma)
    if g == 0.0:
        mod = jnp.ones_like(one_minus_pt)
    elif g.is_integer() and 1.0 <= g <= 8.0:
        mod = one_minus_pt
        for _ in range(int(g) - 1):
            mod = mod * one_minus_pt
    else:
        mod = jnp.power(one_minus_pt, g)

    f = mod * bce                           # alpha applied once on the scalar outside

    # Per-tile partial: reduce over sublanes, store one lane-dense (1, 128) row.
    out_ref[...] = jnp.sum(f, axis=0, keepdims=True).reshape(out_ref.shape)


def focal_loss(logits, targets, alpha: float = 0.25, gamma: float = 2.0,
               reduction: str = "mean", *, tile_bytes: int = 1 << 20):
    """Pallas TPU focal loss matching the PyTorch FocalLoss module.

    logits: (N, C) float32 or bfloat16; targets: (N,) integer class ids.
    """
    N, C = logits.shape
    if logits.dtype not in (jnp.float32, jnp.bfloat16):
        logits = logits.astype(jnp.float32)

    E = N * C
    W = _LANE
    Ep = _round_up(E, W)

    # Flat lane-dense views. The logits reshape is free for a contiguous (N, C)
    # array; the one-hot is written as int8 (1 B/elem). A pad copy happens only
    # when N*C is not a multiple of 128 (padded elements give exactly 0 loss).
    x_flat = logits.reshape(E)
    y_flat = jax.nn.one_hot(targets, C, dtype=jnp.int8).reshape(E)
    if Ep != E:
        x_flat = jnp.pad(x_flat, (0, Ep - E), constant_values=_PAD_LOGIT)
        y_flat = jnp.pad(y_flat, (0, Ep - E))

    R = Ep // W
    x2 = x_flat.reshape(R, W)
    y2 = y_flat.reshape(R, W)

    # Row tile: ~tile_bytes of f32 working set per grid step (amortizes the
    # ~0.35us/step overhead, stays well inside the 16 MiB v5e scoped-VMEM
    # default). Multiples of 32 sublanes keep f32/bf16/int8 blocks aligned.
    tr = max(32, (int(tile_bytes) // (W * 4)) // 32 * 32)
    if R <= tr:
        tr = R                              # single full-array tile (always legal)
    num_tiles = pl.cdiv(R, tr)

    kernel = functools.partial(_focal_kernel, gamma=float(gamma),
                               total_rows=R, block_rows=tr)

    partials = pl.pallas_call(
        kernel,
        out_shape=jax.ShapeDtypeStruct((num_tiles, 1, W), jnp.float32),
        grid=(num_tiles,),
        in_specs=[
            pl.BlockSpec((tr, W), lambda i: (i, 0)),   # logits row-tile
            pl.BlockSpec((tr, W), lambda i: (i, 0)),   # int8 one-hot row-tile
        ],
        out_specs=pl.BlockSpec((1, 1, W), lambda i: (i, 0, 0)),
        compiler_params=pltpu.CompilerParams(
            dimension_semantics=("parallel",)),        # independent tiles (v7x 2-TC)
    )(x2, y2)

    total = alpha * jnp.sum(partials)                  # tiny reduce + hoisted alpha
    if reduction == "mean":
        return total / float(N * C)
    if reduction == "sum":
        return total
    # TODO(synk): reduction='none' (full (N, C) elementwise output) not implemented.
    raise NotImplementedError("reduction='none' is not supported by this kernel")


def _focal_loss_ref(logits, targets, alpha=0.25, gamma=2.0):
    """Pure-JAX reference mirroring the PyTorch module exactly."""
    x = logits.astype(jnp.float32)
    y = jax.nn.one_hot(targets, x.shape[1], dtype=jnp.float32)
    bce = jnp.maximum(x, 0.0) - x * y + jnp.log1p(jnp.exp(-jnp.abs(x)))
    pt = jnp.exp(-bce)
    return jnp.mean(alpha * (1.0 - pt) ** gamma * bce)


if __name__ == "__main__":
    key = jax.random.PRNGKey(0)
    k1, k2, k3, k4, k5, k6 = jax.random.split(key, 6)

    # Small shape consistent with the module: batch=8 clips, 4 classes.
    N, C = 8, 4
    logits = jax.random.normal(k1, (N, C), dtype=jnp.float32) * 2.0
    targets = jax.random.randint(k2, (N,), 0, C, dtype=jnp.int32)
    ref = _focal_loss_ref(logits, targets)
    out = jax.block_until_ready(focal_loss(logits, targets))
    assert jnp.allclose(out, ref, atol=1e-6, rtol=2e-4), (out, ref)

    # 'sum' reduction.
    out_sum = jax.block_until_ready(focal_loss(logits, targets, reduction="sum"))
    assert jnp.allclose(out_sum, ref * N * C, atol=1e-5, rtol=2e-4), (out_sum,
                                                                      ref * N * C)

    # Flat-pad fallback path (N*C = 4000 is not a multiple of 128).
    N2, C2 = 1000, 4
    logits2 = jax.random.normal(k3, (N2, C2), dtype=jnp.float32) * 3.0
    targets2 = jax.random.randint(k4, (N2,), 0, C2, dtype=jnp.int32)
    ref2 = _focal_loss_ref(logits2, targets2)
    out2 = jax.block_until_ready(focal_loss(logits2, targets2))
    assert jnp.allclose(out2, ref2, atol=1e-6, rtol=2e-4), (out2, ref2)

    # Multi-tile + ragged-last-tile masking path: R=100 rows, 32-row tiles -> 4
    # grid steps, last tile has only 4 valid rows.
    N3, C3 = 3200, 4
    logits3 = jax.random.normal(k5, (N3, C3), dtype=jnp.float32) * 3.0
    targets3 = jax.random.randint(k6, (N3,), 0, C3, dtype=jnp.int32)
    ref3 = _focal_loss_ref(logits3, targets3)
    out3 = jax.block_until_ready(
        focal_loss(logits3, targets3, tile_bytes=32 * 128 * 4))
    assert jnp.allclose(out3, ref3, atol=1e-6, rtol=2e-4), (out3, ref3)

    # bf16 logits pass through unwidened (half the HBM read), widened in VMEM.
    lb = logits3.astype(jnp.bfloat16)
    ref_bf16 = _focal_loss_ref(lb, targets3)
    out_bf16 = jax.block_until_ready(
        focal_loss(lb, targets3, tile_bytes=32 * 128 * 4))
    assert jnp.allclose(out_bf16, ref_bf16, atol=1e-6, rtol=2e-4), (out_bf16,
                                                                    ref_bf16)

    print("KERNEL_OK")
</pallas_src>

<mosaic_0001>
module attributes {stable_mosaic.version = 11 : i64} {
  func.func @_focal_kernel(%arg0: i32, %arg1: memref<1x128xf32, #tpu.memory_space<vmem>>, %arg2: memref<1x128xi8, #tpu.memory_space<vmem>>, %arg3: memref<1x1x128xf32, #tpu.memory_space<vmem>>) attributes {dimension_semantics = [#tpu.dimension_semantics<parallel>], iteration_bounds = array<i64: 1>, scalar_prefetch = 0 : i64, scratch_operands = 0 : i64, tpu.core_type = #tpu.core_type<tc>, window_params = [{transform_indices = @transform_0, window_bounds = array<i64: 1, 128>}, {transform_indices = @transform_1, window_bounds = array<i64: 1, 128>}, {transform_indices = @transform_2, window_bounds = array<i64: 1, 1, 128>}]} {
    %c0 = arith.constant 0 : index
    %c0_0 = arith.constant 0 : index
    %0 = vector.load %arg1[%c0, %c0_0] : memref<1x128xf32, #tpu.memory_space<vmem>>, vector<1x128xf32>
    %c0_1 = arith.constant 0 : index
    %c0_2 = arith.constant 0 : index
    %1 = vector.load %arg2[%c0_1, %c0_2] : memref<1x128xi8, #tpu.memory_space<vmem>>, vector<1x128xi8>
    %c0_i8 = arith.constant 0 : i8
    %2 = vector.broadcast %c0_i8 : i8 to vector<1x128xi8>
    %3 = arith.cmpi ne, %1, %2 : vector<1x128xi8>
    %4 = math.absf %0 : vector<1x128xf32>
    %cst = arith.constant -5.000000e-01 : f32
    %5 = vector.broadcast %cst : f32 to vector<1x128xf32>
    %6 = arith.mulf %5, %4 : vector<1x128xf32>
    %7 = math.tanh %6 : vector<1x128xf32>
    %cst_3 = arith.constant 5.000000e-01 : f32
    %8 = vector.broadcast %cst_3 : f32 to vector<1x128xf32>
    %9 = arith.mulf %8, %7 : vector<1x128xf32>
    %cst_4 = arith.constant 5.000000e-01 : f32
    %10 = vector.broadcast %cst_4 : f32 to vector<1x128xf32>
    %11 = arith.addf %9, %10 : vector<1x128xf32>
    %cst_5 = arith.constant 0.000000e+00 : f32
    %12 = vector.broadcast %cst_5 : f32 to vector<1x128xf32>
    %13 = arith.maximumf %0, %12 : vector<1x128xf32>
    %cst_6 = arith.constant 0.000000e+00 : f32
    %14 = vector.broadcast %cst_6 : f32 to vector<1x128xf32>
    %15 = arith.select %3, %0, %14 : vector<1x128xi1>, vector<1x128xf32>
    %16 = arith.subf %13, %15 : vector<1x128xf32>
    %cst_7 = arith.constant 0.000000e+00 : f32
    %17 = vector.broadcast %cst_7 : f32 to vector<1x128xf32>
    %18 = arith.subf %17, %11 : vector<1x128xf32>
    %19 = math.log1p %18 : vector<1x128xf32>
    %20 = arith.subf %16, %19 : vector<1x128xf32>
    %cst_8 = arith.constant 0.000000e+00 : f32
    %21 = vector.broadcast %cst_8 : f32 to vector<1x128xf32>
    %22 = arith.cmpf oge, %0, %21 : vector<1x128xf32>
    %23 = arith.xori %3, %22 : vector<1x128xi1>
    %cst_9 = arith.constant dense<true> : vector<1x128xi1>
    %24 = arith.xori %23, %cst_9 : vector<1x128xi1>
    %cst_10 = arith.constant 1.000000e+00 : f32
    %25 = vector.broadcast %cst_10 : f32 to vector<1x128xf32>
    %26 = arith.subf %25, %11 : vector<1x128xf32>
    %27 = arith.select %24, %11, %26 : vector<1x128xi1>, vector<1x128xf32>
    %28 = arith.mulf %27, %27 : vector<1x128xf32>
    %29 = arith.mulf %28, %20 : vector<1x128xf32>
    %cst_11 = arith.constant dense<0.000000e+00> : vector<128xf32>
    %30 = vector.multi_reduction <add>, %29, %cst_11 [0] : vector<1x128xf32> to vector<128xf32>
    %31 = vector.shape_cast %30 : vector<128xf32> to vector<1x128xf32>
    %32 = vector.shape_cast %31 : vector<1x128xf32> to vector<1x1x128xf32>
    %c0_12 = arith.constant 0 : index
    %c0_13 = arith.constant 0 : index
    %c0_14 = arith.constant 0 : index
    %33 = vector.load %arg3[%c0_12, %c0_13, %c0_14] : memref<1x1x128xf32, #tpu.memory_space<vmem>>, vector<1x1x128xf32>
    tpu.vector_store %arg3[%c0_12, %c0_13, %c0_14], %32 {strides = array<i32>} : memref<1x1x128xf32, #tpu.memory_space<vmem>>, vector<1x1x128xf32>,
    return
  }
  func.func @transform_0(%arg0: i32) -> (i32, i32) {
    %c0_i32 = arith.constant 0 : i32
    %c0_i32_0 = arith.constant 0 : i32
    return %arg0, %c0_i32 : i32, i32
  }
  func.func @transform_1(%arg0: i32) -> (i32, i32) {
    %c0_i32 = arith.constant 0 : i32
    %c0_i32_0 = arith.constant 0 : i32
    return %arg0, %c0_i32 : i32, i32
  }
  func.func @transform_2(%arg0: i32) -> (i32, i32, i32) {
    %c0_i32 = arith.constant 0 : i32
    %c0_i32_0 = arith.constant 0 : i32
    %c0_i32_1 = arith.constant 0 : i32
    return %arg0, %c0_i32, %c0_i32_0 : i32, i32, i32
  }
}

</mosaic_0001>

<llo_original>
// kernel: tpu_custom_call.1
$region0: #{tpu_custom_call.1}
  #allocation0 [shape = 'u32[]', space=smem, size = 0x4, offset = 0x4, fixed_abs, tag = 'smem constant byte address 0x4 - core index']
  #allocation1 [shape = 'u32[144,128]{1,0:T(1,128)}', space=vmem, size = 0x12000, scoped, tag = 'internal scratch']
  %s0 = inlined_call_operand.hbm [shape: f32[1,128], index: 0, kind: input, shape index: {}]
  %s1 = inlined_call_operand.vmem [shape: s8[1,128], index: 1, kind: input, shape index: {}]
  %s2 = inlined_call_operand.hbm [shape: f32[1,1,128], index: 2, kind: output, shape index: {}]
  %s3 = sld [smem:[#allocation0]]
  $region22: #{tpu_custom_call.1} parent=0
    _
  %s5 = ssub.s32 1, %s3
  %s6 = scalar_select 0, %s5, %s3
  $region1: #{tpu_custom_call.1} parent=0
    #allocation2 [shape = 'u8[512]{0}', space=vmem, size = 0x400, scoped, tag = 'input window, operand 0, single buffered']
    #allocation3 [shape = 's32[1]{0}', space=sflag, size = 0x4, scoped, tag = 'scoped memory for tpu_custom_call.1']
    #allocation4 [shape = 's32[1]{0}', space=sflag, size = 0x4, scoped, tag = 'scoped memory for tpu_custom_call.1']
    #allocation5 [shape = 'u8[512]{0}', space=vmem, size = 0x400, scoped, tag = 'output window, operand 0, single buffered']
    %7 = vsyncpa [#allocation3], 0
    %8 = vsyncpa [#allocation4], 0
    // Predicated region
    $region2: #{tpu_custom_call.1} parent=1 // pred_check
      _
    $region3: #{tpu_custom_call.1} parent=1 // pred_check_branch
      %10 = sbr.rel (0) target = $region5
    $region4: #{tpu_custom_call.1} parent=1 // pred_region
      %s12 = ssub.s32 16, 16
      %13 = vsyncadd [#allocation3], %s12
      %s15 = sshll.u32 [#allocation2], 4
      %s16 = int_to_ptr.vmem [resolvable:$true] %s15
      %18 = dma.hbm_to_vmem [thread:$0]  %s0, 16, %s16, [#allocation3]
    $region5: #{tpu_custom_call.1} parent=1 // pred_fallthru
      _
    // Predicated region
    $region6: #{tpu_custom_call.1} parent=1 // pred_check
      _
    $region7: #{tpu_custom_call.1} parent=1 // pred_check_branch
      %20 = sbr.rel (0) target = $region9
    $region8: #{tpu_custom_call.1} parent=1 // pred_region
      _
    $region9: #{tpu_custom_call.1} parent=1 // pred_fallthru
      _
    // Predicated region
    $region10: #{tpu_custom_call.1} parent=1 // pred_check
      _
    $region11: #{tpu_custom_call.1} parent=1 // pred_check_branch
      %22 = sbr.rel (0) target = $region13
    $region12: #{tpu_custom_call.1} parent=1 // pred_region
      %23 = dma.done [#allocation3], 16
    $region13: #{tpu_custom_call.1} parent=1 // pred_fallthru
      _
    %v26 = vld [vmem:[#allocation2] sm:$0x1]
    %v27 = vld [vmem:[%s1] sm:$0x1]
    %vm28 = vnez %v27
    %v29 = vand.u32 2147483647, %v26
    %v30 = vmul.f32 %v29, -0.5
    %v31 = vtanh.pop %v30
    %v32 = vmul.f32 %v31, 0.5
    %v33 = vadd.f32 %v32, 0.5
    %v34 = vmax.f32 %v26, 0.0
    %v35 = vsel %vm28, 16843009, 0
    %v36 = vunpack.c.0.s8 %v35
    %vm37 = vcmp.ne.s32.totalorder %v36, 0
    %v38 = vsel %vm37, %v26, 0.0
    %v39 = vsub.f32 %v34, %v38
    %v40 = vsub.f32 0.0, %v33
    %v41 = vadd.f32 %v40, 1.0
    %v42 = vlog2.pop %v41
    %v43 = vmul.f32 %v42, 0.6931472
    %v44 = vmul.f32 -0.5, %v40
    %v45 = vadd.f32 %v44, 1.0
    %v46 = vmul.f32 %v45, %v40
    %v47 = vand.u32 2147483647, %v40
    %vm48 = vcmp.lt.f32.partialorder %v47, 0.0004427343
    %v49 = vsel %vm48, %v46, %v43
    %v50 = vsub.f32 %v39, %v49
    %vm51 = vcmp.ge.f32.partialorder %v26, 0.0
    %v52 = vsel %vm51, 1, 0
    %v53 = vpack.c.b16 %v52, %v52
    %v54 = vpack.c.b8 %v53, %v53
    %vm55 = vnez %v54
    %vm56 = vmxor %vm28, %vm55
    %v57 = vsel 1, 1, 0
    %v58 = vpack.c.b16 %v57, %v57
    %v59 = vpack.c.b8 %v58, %v58
    %vm60 = vnez %v59
    %vm61 = vmxor %vm56, %vm60
    %v62 = vsub.f32 1.0, %v33
    %v63 = vsel %vm61, 16843009, 0
    %v64 = vunpack.c.0.s8 %v63
    %vm65 = vcmp.ne.s32.totalorder %v64, 0
    %v66 = vsel %vm65, %v33, %v62
    %v67 = vmul.f32 %v66, %v66
    %v68 = vmul.f32 %v67, %v50
    %v69 = vadd.f32 %v68, 0.0
    %70 = vst [vmem:[#allocation5] sm:$0x1] %v69
    // Predicated region
    $region14: #{tpu_custom_call.1} parent=1 // pred_check
      _
    $region15: #{tpu_custom_call.1} parent=1 // pred_check_branch
      %72 = sbr.rel (0) target = $region17
    $region16: #{tpu_custom_call.1} parent=1 // pred_region
      %s74 = ssub.s32 16, 16
      %75 = vsyncadd [#allocation4], %s74
      %s77 = sshll.u32 [#allocation5], 4
      %s78 = int_to_ptr.vmem [resolvable:$true] %s77
      %80 = dma.vmem_to_hbm [thread:$0]  %s78, 16, %s2, [#allocation4]
    $region17: #{tpu_custom_call.1} parent=1 // pred_fallthru
      _
    // Predicated region
    $region18: #{tpu_custom_call.1} parent=1 // pred_check
      _
    $region19: #{tpu_custom_call.1} parent=1 // pred_check_branch
      %82 = sbr.rel (0) target = $region21
    $region20: #{tpu_custom_call.1} parent=1 // pred_region
      %83 = dma.done [#allocation4], 16
    $region21: #{tpu_custom_call.1} parent=1 // pred_fallthru
      _
    %84 = vsyncpa [#allocation3], 1
    %85 = vsyncpa [#allocation4], 1

</llo_original>
